<compile_context>
chip_gen: v7x
topology: tpu7x:2x2x1
jax: 0.10.0
libtpu: 0.0.40
codegen_flags: <defaults>
</compile_context>

<pallas_src>
import jax
import jax.numpy as jnp
from jax.experimental import pallas as pl
from jax.experimental.pallas import tpu as pltpu


def _round_up(n, m):
    return ((n + m - 1) // m) * m


def mlp_kernel(x_ref, w1_ref, b1_ref, w2_ref, b2_ref, o_ref):
    # x_ref: (2, TS, 128) VMEM tile (batch on sublanes x lanes); params are SMEM scalars.
    x0 = x_ref[0]                           # (TS, 128) -- feature 0 for TS*128 rows
    x1 = x_ref[1]                           # (TS, 128) -- feature 1

    y = b2_ref[0]                           # scalar accumulator seed (broadcasts)
    # Fully unrolled hidden layer: 10 neurons, pure VPU FMAs + EUP tanh.
    for j in range(10):
        h_j = jnp.tanh(x0 * w1_ref[j] + x1 * w1_ref[10 + j] + b1_ref[j])
        y = y + w2_ref[j] * h_j             # (TS, 128)

    # sigmoid(y) == 0.5 * (tanh(y/2) + 1): guaranteed single EUP op per element.
    o_ref[...] = 0.5 * (jnp.tanh(0.5 * y) + 1.0)


def mlp_forward(x, w1, b1, w2, b2):
    """x: (B, 2) f32; w1: (2, 10); b1: (10,); w2: (10, 1); b2: (1,). Returns (B, 1)."""
    B = x.shape[0]

    # Dense (sublane, lane) batch layout: 128 rows per lane-row, TS lane-rows per tile.
    rows = -(-B // 128)                                   # ceil(B / 128)
    # Aim for ~8 grid steps (pipelining + v7x megacore), cap tile at 512 lane-rows
    # (~512 KiB in + 256 KiB out per step), floor at the 8-sublane granule.
    TS = min(512, max(8, _round_up(-(-rows // 8), 8)))
    rows_pad = _round_up(rows, TS)
    B_pad = rows_pad * 128
    grid = rows_pad // TS

    # Pad batch to B_pad, then (B_pad, 2) -> (2, rows_pad, 128). XLA fuses pad+transpose
    # into a single pass over x.
    xp = jnp.zeros((B_pad, 2), jnp.float32).at[:B, :].set(x.astype(jnp.float32))
    x3 = xp.T.reshape(2, rows_pad, 128)

    # Flatten params to small 1-D SMEM arrays (row-major: w1f[i*10 + j] = w1[i, j]).
    w1f = w1.reshape(-1).astype(jnp.float32)   # (20,)
    b1f = b1.reshape(-1).astype(jnp.float32)   # (10,)
    w2f = w2.reshape(-1).astype(jnp.float32)   # (10,)
    b2f = b2.reshape(-1).astype(jnp.float32)   # (1,)

    smem = pl.BlockSpec(memory_space=pltpu.MemorySpace.SMEM)

    y3 = pl.pallas_call(
        mlp_kernel,
        out_shape=jax.ShapeDtypeStruct((rows_pad, 128), jnp.float32),
        grid=(grid,),
        in_specs=[
            pl.BlockSpec((2, TS, 128), lambda i: (0, i, 0)),   # x tile (dense batch)
            smem, smem, smem, smem,                            # w1, b1, w2, b2 scalars
        ],
        out_specs=pl.BlockSpec((TS, 128), lambda i: (i, 0)),
        compiler_params=pltpu.CompilerParams(
            dimension_semantics=("parallel",),
        ),
        cost_estimate=pl.CostEstimate(
            flops=62 * B_pad,            # ~60 FMAs/adds + sigmoid affine per row
            transcendentals=11 * B_pad,  # 10 tanh + 1 tanh-sigmoid per row
            bytes_accessed=12 * B_pad,   # 8 B in + 4 B out per padded row (dense layout)
        ),
    )(x3, w1f, b1f, w2f, b2f)

    # Padded rows (x = 0) produce finite values and are sliced off here.
    return y3.reshape(-1)[:B].reshape(B, 1)


def init_params(key):
    # Deterministic PyTorch-style uniform(-1/sqrt(fan_in), +1/sqrt(fan_in)) init.
    k1, k2, k3, k4 = jax.random.split(key, 4)
    bound1 = 1.0 / jnp.sqrt(2.0)
    bound2 = 1.0 / jnp.sqrt(10.0)
    w1 = jax.random.uniform(k1, (2, 10), jnp.float32, -bound1, bound1)
    b1 = jax.random.uniform(k2, (10,), jnp.float32, -bound1, bound1)
    w2 = jax.random.uniform(k3, (10, 1), jnp.float32, -bound2, bound2)
    b2 = jax.random.uniform(k4, (1,), jnp.float32, -bound2, bound2)
    return w1, b1, w2, b2


def _reference(x, w1, b1, w2, b2):
    return jax.nn.sigmoid(jnp.tanh(x @ w1 + b1) @ w2 + b2)


if __name__ == "__main__":
    root = jax.random.PRNGKey(0)
    pkey, xkey1, xkey2 = jax.random.split(root, 3)
    w1, b1, w2, b2 = init_params(pkey)

    # Small demo batch plus a second size that exercises lane/sublane padding + slicing.
    for B, xkey in ((8, xkey1), (200, xkey2)):
        x = jax.random.normal(xkey, (B, 2), jnp.float32)
        out = jax.block_until_ready(mlp_forward(x, w1, b1, w2, b2))
        ref = _reference(x, w1, b1, w2, b2)
        assert out.shape == (B, 1)
        assert jnp.allclose(out, ref, atol=1e-5, rtol=1e-5)

    print("KERNEL_OK")
</pallas_src>

<mosaic_0001>
module attributes {stable_mosaic.version = 11 : i64} {
  func.func @mlp_kernel(%arg0: i32, %arg1: memref<2x8x128xf32, #tpu.memory_space<vmem>>, %arg2: memref<20xf32, #tpu.memory_space<smem>>, %arg3: memref<10xf32, #tpu.memory_space<smem>>, %arg4: memref<10xf32, #tpu.memory_space<smem>>, %arg5: memref<1xf32, #tpu.memory_space<smem>>, %arg6: memref<8x128xf32, #tpu.memory_space<vmem>>) attributes {dimension_semantics = [#tpu.dimension_semantics<parallel>], iteration_bounds = array<i64: 1>, scalar_prefetch = 0 : i64, scratch_operands = 0 : i64, tpu.core_type = #tpu.core_type<tc>, window_params = [{transform_indices = @transform_0, window_bounds = array<i64: 2, 8, 128>}, {transform_indices = @transform_1, window_bounds = array<i64: 20>}, {transform_indices = @transform_2, window_bounds = array<i64: 10>}, {transform_indices = @transform_3, window_bounds = array<i64: 10>}, {transform_indices = @transform_4, window_bounds = array<i64: 1>}, {transform_indices = @transform_5, window_bounds = array<i64: 8, 128>}]} {
    %c0 = arith.constant 0 : index
    %c0_0 = arith.constant 0 : index
    %c0_1 = arith.constant 0 : index
    %0 = vector.load %arg1[%c0, %c0_0, %c0_1] : memref<2x8x128xf32, #tpu.memory_space<vmem>>, vector<1x8x128xf32>
    %1 = vector.shape_cast %0 : vector<1x8x128xf32> to vector<8x128xf32>
    %c1 = arith.constant 1 : index
    %c0_2 = arith.constant 0 : index
    %c0_3 = arith.constant 0 : index
    %2 = vector.load %arg1[%c1, %c0_2, %c0_3] : memref<2x8x128xf32, #tpu.memory_space<vmem>>, vector<1x8x128xf32>
    %3 = vector.shape_cast %2 : vector<1x8x128xf32> to vector<8x128xf32>
    %c0_4 = arith.constant 0 : index
    %4 = memref.load %arg5[%c0_4] : memref<1xf32, #tpu.memory_space<smem>>
    %c0_5 = arith.constant 0 : index
    %5 = memref.load %arg2[%c0_5] : memref<20xf32, #tpu.memory_space<smem>>
    %6 = vector.broadcast %5 : f32 to vector<8x128xf32>
    %7 = arith.mulf %1, %6 : vector<8x128xf32>
    %c10 = arith.constant 10 : index
    %8 = memref.load %arg2[%c10] : memref<20xf32, #tpu.memory_space<smem>>
    %9 = vector.broadcast %8 : f32 to vector<8x128xf32>
    %10 = arith.mulf %3, %9 : vector<8x128xf32>
    %11 = arith.addf %7, %10 : vector<8x128xf32>
    %c0_6 = arith.constant 0 : index
    %12 = memref.load %arg3[%c0_6] : memref<10xf32, #tpu.memory_space<smem>>
    %13 = vector.broadcast %12 : f32 to vector<8x128xf32>
    %14 = arith.addf %11, %13 : vector<8x128xf32>
    %15 = math.tanh %14 : vector<8x128xf32>
    %c0_7 = arith.constant 0 : index
    %16 = memref.load %arg4[%c0_7] : memref<10xf32, #tpu.memory_space<smem>>
    %17 = vector.broadcast %16 : f32 to vector<8x128xf32>
    %18 = arith.mulf %17, %15 : vector<8x128xf32>
    %19 = vector.broadcast %4 : f32 to vector<8x128xf32>
    %20 = arith.addf %19, %18 : vector<8x128xf32>
    %c1_8 = arith.constant 1 : index
    %21 = memref.load %arg2[%c1_8] : memref<20xf32, #tpu.memory_space<smem>>
    %22 = vector.broadcast %21 : f32 to vector<8x128xf32>
    %23 = arith.mulf %1, %22 : vector<8x128xf32>
    %c11 = arith.constant 11 : index
    %24 = memref.load %arg2[%c11] : memref<20xf32, #tpu.memory_space<smem>>
    %25 = vector.broadcast %24 : f32 to vector<8x128xf32>
    %26 = arith.mulf %3, %25 : vector<8x128xf32>
    %27 = arith.addf %23, %26 : vector<8x128xf32>
    %c1_9 = arith.constant 1 : index
    %28 = memref.load %arg3[%c1_9] : memref<10xf32, #tpu.memory_space<smem>>
    %29 = vector.broadcast %28 : f32 to vector<8x128xf32>
    %30 = arith.addf %27, %29 : vector<8x128xf32>
    %31 = math.tanh %30 : vector<8x128xf32>
    %c1_10 = arith.constant 1 : index
    %32 = memref.load %arg4[%c1_10] : memref<10xf32, #tpu.memory_space<smem>>
    %33 = vector.broadcast %32 : f32 to vector<8x128xf32>
    %34 = arith.mulf %33, %31 : vector<8x128xf32>
    %35 = arith.addf %20, %34 : vector<8x128xf32>
    %c2 = arith.constant 2 : index
    %36 = memref.load %arg2[%c2] : memref<20xf32, #tpu.memory_space<smem>>
    %37 = vector.broadcast %36 : f32 to vector<8x128xf32>
    %38 = arith.mulf %1, %37 : vector<8x128xf32>
    %c12 = arith.constant 12 : index
    %39 = memref.load %arg2[%c12] : memref<20xf32, #tpu.memory_space<smem>>
    %40 = vector.broadcast %39 : f32 to vector<8x128xf32>
    %41 = arith.mulf %3, %40 : vector<8x128xf32>
    %42 = arith.addf %38, %41 : vector<8x128xf32>
    %c2_11 = arith.constant 2 : index
    %43 = memref.load %arg3[%c2_11] : memref<10xf32, #tpu.memory_space<smem>>
    %44 = vector.broadcast %43 : f32 to vector<8x128xf32>
    %45 = arith.addf %42, %44 : vector<8x128xf32>
    %46 = math.tanh %45 : vector<8x128xf32>
    %c2_12 = arith.constant 2 : index
    %47 = memref.load %arg4[%c2_12] : memref<10xf32, #tpu.memory_space<smem>>
    %48 = vector.broadcast %47 : f32 to vector<8x128xf32>
    %49 = arith.mulf %48, %46 : vector<8x128xf32>
    %50 = arith.addf %35, %49 : vector<8x128xf32>
    %c3 = arith.constant 3 : index
    %51 = memref.load %arg2[%c3] : memref<20xf32, #tpu.memory_space<smem>>
    %52 = vector.broadcast %51 : f32 to vector<8x128xf32>
    %53 = arith.mulf %1, %52 : vector<8x128xf32>
    %c13 = arith.constant 13 : index
    %54 = memref.load %arg2[%c13] : memref<20xf32, #tpu.memory_space<smem>>
    %55 = vector.broadcast %54 : f32 to vector<8x128xf32>
    %56 = arith.mulf %3, %55 : vector<8x128xf32>
    %57 = arith.addf %53, %56 : vector<8x128xf32>
    %c3_13 = arith.constant 3 : index
    %58 = memref.load %arg3[%c3_13] : memref<10xf32, #tpu.memory_space<smem>>
    %59 = vector.broadcast %58 : f32 to vector<8x128xf32>
    %60 = arith.addf %57, %59 : vector<8x128xf32>
    %61 = math.tanh %60 : vector<8x128xf32>
    %c3_14 = arith.constant 3 : index
    %62 = memref.load %arg4[%c3_14] : memref<10xf32, #tpu.memory_space<smem>>
    %63 = vector.broadcast %62 : f32 to vector<8x128xf32>
    %64 = arith.mulf %63, %61 : vector<8x128xf32>
    %65 = arith.addf %50, %64 : vector<8x128xf32>
    %c4 = arith.constant 4 : index
    %66 = memref.load %arg2[%c4] : memref<20xf32, #tpu.memory_space<smem>>
    %67 = vector.broadcast %66 : f32 to vector<8x128xf32>
    %68 = arith.mulf %1, %67 : vector<8x128xf32>
    %c14 = arith.constant 14 : index
    %69 = memref.load %arg2[%c14] : memref<20xf32, #tpu.memory_space<smem>>
    %70 = vector.broadcast %69 : f32 to vector<8x128xf32>
    %71 = arith.mulf %3, %70 : vector<8x128xf32>
    %72 = arith.addf %68, %71 : vector<8x128xf32>
    %c4_15 = arith.constant 4 : index
    %73 = memref.load %arg3[%c4_15] : memref<10xf32, #tpu.memory_space<smem>>
    %74 = vector.broadcast %73 : f32 to vector<8x128xf32>
    %75 = arith.addf %72, %74 : vector<8x128xf32>
    %76 = math.tanh %75 : vector<8x128xf32>
    %c4_16 = arith.constant 4 : index
    %77 = memref.load %arg4[%c4_16] : memref<10xf32, #tpu.memory_space<smem>>
    %78 = vector.broadcast %77 : f32 to vector<8x128xf32>
    %79 = arith.mulf %78, %76 : vector<8x128xf32>
    %80 = arith.addf %65, %79 : vector<8x128xf32>
    %c5 = arith.constant 5 : index
    %81 = memref.load %arg2[%c5] : memref<20xf32, #tpu.memory_space<smem>>
    %82 = vector.broadcast %81 : f32 to vector<8x128xf32>
    %83 = arith.mulf %1, %82 : vector<8x128xf32>
    %c15 = arith.constant 15 : index
    %84 = memref.load %arg2[%c15] : memref<20xf32, #tpu.memory_space<smem>>
    %85 = vector.broadcast %84 : f32 to vector<8x128xf32>
    %86 = arith.mulf %3, %85 : vector<8x128xf32>
    %87 = arith.addf %83, %86 : vector<8x128xf32>
    %c5_17 = arith.constant 5 : index
    %88 = memref.load %arg3[%c5_17] : memref<10xf32, #tpu.memory_space<smem>>
    %89 = vector.broadcast %88 : f32 to vector<8x128xf32>
    %90 = arith.addf %87, %89 : vector<8x128xf32>
    %91 = math.tanh %90 : vector<8x128xf32>
    %c5_18 = arith.constant 5 : index
    %92 = memref.load %arg4[%c5_18] : memref<10xf32, #tpu.memory_space<smem>>
    %93 = vector.broadcast %92 : f32 to vector<8x128xf32>
    %94 = arith.mulf %93, %91 : vector<8x128xf32>
    %95 = arith.addf %80, %94 : vector<8x128xf32>
    %c6 = arith.constant 6 : index
    %96 = memref.load %arg2[%c6] : memref<20xf32, #tpu.memory_space<smem>>
    %97 = vector.broadcast %96 : f32 to vector<8x128xf32>
    %98 = arith.mulf %1, %97 : vector<8x128xf32>
    %c16 = arith.constant 16 : index
    %99 = memref.load %arg2[%c16] : memref<20xf32, #tpu.memory_space<smem>>
    %100 = vector.broadcast %99 : f32 to vector<8x128xf32>
    %101 = arith.mulf %3, %100 : vector<8x128xf32>
    %102 = arith.addf %98, %101 : vector<8x128xf32>
    %c6_19 = arith.constant 6 : index
    %103 = memref.load %arg3[%c6_19] : memref<10xf32, #tpu.memory_space<smem>>
    %104 = vector.broadcast %103 : f32 to vector<8x128xf32>
    %105 = arith.addf %102, %104 : vector<8x128xf32>
    %106 = math.tanh %105 : vector<8x128xf32>
    %c6_20 = arith.constant 6 : index
    %107 = memref.load %arg4[%c6_20] : memref<10xf32, #tpu.memory_space<smem>>
    %108 = vector.broadcast %107 : f32 to vector<8x128xf32>
    %109 = arith.mulf %108, %106 : vector<8x128xf32>
    %110 = arith.addf %95, %109 : vector<8x128xf32>
    %c7 = arith.constant 7 : index
    %111 = memref.load %arg2[%c7] : memref<20xf32, #tpu.memory_space<smem>>
    %112 = vector.broadcast %111 : f32 to vector<8x128xf32>
    %113 = arith.mulf %1, %112 : vector<8x128xf32>
    %c17 = arith.constant 17 : index
    %114 = memref.load %arg2[%c17] : memref<20xf32, #tpu.memory_space<smem>>
    %115 = vector.broadcast %114 : f32 to vector<8x128xf32>
    %116 = arith.mulf %3, %115 : vector<8x128xf32>
    %117 = arith.addf %113, %116 : vector<8x128xf32>
    %c7_21 = arith.constant 7 : index
    %118 = memref.load %arg3[%c7_21] : memref<10xf32, #tpu.memory_space<smem>>
    %119 = vector.broadcast %118 : f32 to vector<8x128xf32>
    %120 = arith.addf %117, %119 : vector<8x128xf32>
    %121 = math.tanh %120 : vector<8x128xf32>
    %c7_22 = arith.constant 7 : index
    %122 = memref.load %arg4[%c7_22] : memref<10xf32, #tpu.memory_space<smem>>
    %123 = vector.broadcast %122 : f32 to vector<8x128xf32>
    %124 = arith.mulf %123, %121 : vector<8x128xf32>
    %125 = arith.addf %110, %124 : vector<8x128xf32>
    %c8 = arith.constant 8 : index
    %126 = memref.load %arg2[%c8] : memref<20xf32, #tpu.memory_space<smem>>
    %127 = vector.broadcast %126 : f32 to vector<8x128xf32>
    %128 = arith.mulf %1, %127 : vector<8x128xf32>
    %c18 = arith.constant 18 : index
    %129 = memref.load %arg2[%c18] : memref<20xf32, #tpu.memory_space<smem>>
    %130 = vector.broadcast %129 : f32 to vector<8x128xf32>
    %131 = arith.mulf %3, %130 : vector<8x128xf32>
    %132 = arith.addf %128, %131 : vector<8x128xf32>
    %c8_23 = arith.constant 8 : index
    %133 = memref.load %arg3[%c8_23] : memref<10xf32, #tpu.memory_space<smem>>
    %134 = vector.broadcast %133 : f32 to vector<8x128xf32>
    %135 = arith.addf %132, %134 : vector<8x128xf32>
    %136 = math.tanh %135 : vector<8x128xf32>
    %c8_24 = arith.constant 8 : index
    %137 = memref.load %arg4[%c8_24] : memref<10xf32, #tpu.memory_space<smem>>
    %138 = vector.broadcast %137 : f32 to vector<8x128xf32>
    %139 = arith.mulf %138, %136 : vector<8x128xf32>
    %140 = arith.addf %125, %139 : vector<8x128xf32>
    %c9 = arith.constant 9 : index
    %141 = memref.load %arg2[%c9] : memref<20xf32, #tpu.memory_space<smem>>
    %142 = vector.broadcast %141 : f32 to vector<8x128xf32>
    %143 = arith.mulf %1, %142 : vector<8x128xf32>
    %c19 = arith.constant 19 : index
    %144 = memref.load %arg2[%c19] : memref<20xf32, #tpu.memory_space<smem>>
    %145 = vector.broadcast %144 : f32 to vector<8x128xf32>
    %146 = arith.mulf %3, %145 : vector<8x128xf32>
    %147 = arith.addf %143, %146 : vector<8x128xf32>
    %c9_25 = arith.constant 9 : index
    %148 = memref.load %arg3[%c9_25] : memref<10xf32, #tpu.memory_space<smem>>
    %149 = vector.broadcast %148 : f32 to vector<8x128xf32>
    %150 = arith.addf %147, %149 : vector<8x128xf32>
    %151 = math.tanh %150 : vector<8x128xf32>
    %c9_26 = arith.constant 9 : index
    %152 = memref.load %arg4[%c9_26] : memref<10xf32, #tpu.memory_space<smem>>
    %153 = vector.broadcast %152 : f32 to vector<8x128xf32>
    %154 = arith.mulf %153, %151 : vector<8x128xf32>
    %155 = arith.addf %140, %154 : vector<8x128xf32>
    %cst = arith.constant 5.000000e-01 : f32
    %156 = vector.broadcast %cst : f32 to vector<8x128xf32>
    %157 = arith.mulf %156, %155 : vector<8x128xf32>
    %158 = math.tanh %157 : vector<8x128xf32>
    %cst_27 = arith.constant 1.000000e+00 : f32
    %159 = vector.broadcast %cst_27 : f32 to vector<8x128xf32>
    %160 = arith.addf %158, %159 : vector<8x128xf32>
    %cst_28 = arith.constant 5.000000e-01 : f32
    %161 = vector.broadcast %cst_28 : f32 to vector<8x128xf32>
    %162 = arith.mulf %161, %160 : vector<8x128xf32>
    %c0_29 = arith.constant 0 : index
    %c0_30 = arith.constant 0 : index
    %163 = vector.load %arg6[%c0_29, %c0_30] : memref<8x128xf32, #tpu.memory_space<vmem>>, vector<8x128xf32>
    tpu.vector_store %arg6[%c0_29, %c0_30], %162 {strides = array<i32>} : memref<8x128xf32, #tpu.memory_space<vmem>>, vector<8x128xf32>,
    return
  }
  func.func @transform_0(%arg0: i32) -> (i32, i32, i32) {
    %c0_i32 = arith.constant 0 : i32
    %c0_i32_0 = arith.constant 0 : i32
    %c0_i32_1 = arith.constant 0 : i32
    return %c0_i32, %arg0, %c0_i32_0 : i32, i32, i32
  }
  func.func @transform_1(%arg0: i32) -> i32 {
    %c0_i32 = arith.constant 0 : i32
    %c0_i32_0 = arith.constant 0 : i32
    return %c0_i32 : i32
  }
  func.func @transform_2(%arg0: i32) -> i32 {
    %c0_i32 = arith.constant 0 : i32
    %c0_i32_0 = arith.constant 0 : i32
    return %c0_i32 : i32
  }
  func.func @transform_3(%arg0: i32) -> i32 {
    %c0_i32 = arith.constant 0 : i32
    %c0_i32_0 = arith.constant 0 : i32
    return %c0_i32 : i32
  }
  func.func @transform_4(%arg0: i32) -> i32 {
    %c0_i32 = arith.constant 0 : i32
    %c0_i32_0 = arith.constant 0 : i32
    return %c0_i32 : i32
  }
  func.func @transform_5(%arg0: i32) -> (i32, i32) {
    %c0_i32 = arith.constant 0 : i32
    %c0_i32_0 = arith.constant 0 : i32
    return %arg0, %c0_i32 : i32, i32
  }
}

</mosaic_0001>

<llo_original>
// kernel: tpu_custom_call.1
$region0: #{tpu_custom_call.1}
  #allocation0 [shape = 'u32[]', space=smem, size = 0x4, offset = 0x4, fixed_abs, tag = 'smem constant byte address 0x4 - core index']
  #allocation1 [shape = 'u32[144,128]{1,0:T(1,128)}', space=vmem, size = 0x12000, scoped, tag = 'internal scratch']
  #allocation2 [shape = 'f32[1]{0:T(128)S(6)}', space=smem, size = 0x200, scoped, tag = 'scoped memory for tpu_custom_call.1']
  %s0 = inlined_call_operand.hbm [shape: f32[2,8,128], index: 0, kind: input, shape index: {}]
  %s1 = inlined_call_operand.vmem [shape: f32[20], index: 1, kind: input, shape index: {}]
  %s2 = inlined_call_operand.vmem [shape: f32[10], index: 2, kind: input, shape index: {}]
  %s3 = inlined_call_operand.vmem [shape: f32[10], index: 3, kind: input, shape index: {}]
  %s4 = inlined_call_operand.<no memory space> [shape: f32[1], index: 4, kind: input, shape index: {}]
  %s5 = inlined_call_operand.hbm [shape: f32[8,128], index: 5, kind: output, shape index: {}]
  %s6 = sld [smem:[#allocation0]]
  $region46: #{tpu_custom_call.1} parent=0
    _
  %s8 = ssub.s32 1, %s6
  %s9 = scalar_select 0, %s8, %s6
  %10 = sst [smem:[#allocation2]] %s4
  $region1: #{tpu_custom_call.1} parent=0
    #allocation3 [shape = 'u8[8192]{0}', space=vmem, size = 0x2000, scoped, tag = 'input window, operand 0, single buffered']
    #allocation4 [shape = 's32[1]{0}', space=sflag, size = 0x4, scoped, tag = 'scoped memory for tpu_custom_call.1']
    #allocation5 [shape = 's32[1]{0}', space=sflag, size = 0x4, scoped, tag = 'scoped memory for tpu_custom_call.1']
    #allocation6 [shape = 's32[1]{0}', space=sflag, size = 0x4, scoped, tag = 'scoped memory for tpu_custom_call.1']
    #allocation7 [shape = 'u8[512]{0}', space=smem, size = 0x200, scoped, tag = 'input window, operand 1, single buffered']
    #allocation8 [shape = 'u8[512]{0}', space=smem, size = 0x200, scoped, tag = 'input window, operand 2, single buffered']
    #allocation9 [shape = 's32[1]{0}', space=sflag, size = 0x4, scoped, tag = 'scoped memory for tpu_custom_call.1']
    #allocation10 [shape = 'u8[512]{0}', space=smem, size = 0x200, scoped, tag = 'input window, operand 3, single buffered']
    #allocation11 [shape = 'u8[4096]{0}', space=vmem, size = 0x1000, scoped, tag = 'output window, operand 0, single buffered']
    %11 = vsyncpa [#allocation4], 0
    %12 = vsyncpa [#allocation6], 0
    %13 = vsyncpa [#allocation9], 0
    %14 = vsyncpa [#allocation5], 0
    // Predicated region
    $region2: #{tpu_custom_call.1} parent=1 // pred_check
      _
    $region3: #{tpu_custom_call.1} parent=1 // pred_check_branch
      %16 = sbr.rel (0) target = $region5
    $region4: #{tpu_custom_call.1} parent=1 // pred_region
      %s18 = ssub.s32 256, 256
      %19 = vsyncadd [#allocation4], %s18
      %s20 = sshll.u32 [#allocation3], 4
      %s21 = int_to_ptr.vmem [resolvable:$true] %s20
      %26 = dma.hbm_to_vmem [thread:$0]  %s0, 256, %s21, [#allocation4], 128, 128, 8
    $region5: #{tpu_custom_call.1} parent=1 // pred_fallthru
      _
    // Predicated region
    $region6: #{tpu_custom_call.1} parent=1 // pred_check
      _
    $region7: #{tpu_custom_call.1} parent=1 // pred_check_branch
      %28 = sbr.rel (0) target = $region9
    $region8: #{tpu_custom_call.1} parent=1 // pred_region
      %s30 = ssub.s32 16, 16
      %31 = vsyncadd [#allocation6], %s30
      %s33 = sshll.u32 %s1, 4
      %s34 = int_to_ptr.vmem [resolvable:$true] %s33
      %36 = dma.vmem_to_smem %s34, 16, [#allocation7], [#allocation6]
    $region9: #{tpu_custom_call.1} parent=1 // pred_fallthru
      _
    // Predicated region
    $region10: #{tpu_custom_call.1} parent=1 // pred_check
      _
    $region11: #{tpu_custom_call.1} parent=1 // pred_check_branch
      %38 = sbr.rel (0) target = $region13
    $region12: #{tpu_custom_call.1} parent=1 // pred_region
      %s40 = ssub.s32 16, 16
      %41 = vsyncadd [#allocation9], %s40
      %s43 = sshll.u32 %s2, 4
      %s44 = int_to_ptr.vmem [resolvable:$true] %s43
      %46 = dma.vmem_to_smem %s44, 16, [#allocation8], [#allocation9]
    $region13: #{tpu_custom_call.1} parent=1 // pred_fallthru
      _
    // Predicated region
    $region14: #{tpu_custom_call.1} parent=1 // pred_check
      _
    $region15: #{tpu_custom_call.1} parent=1 // pred_check_branch
      %48 = sbr.rel (0) target = $region17
    $region16: #{tpu_custom_call.1} parent=1 // pred_region
      %s50 = ssub.s32 16, 16
      %51 = vsyncadd [#allocation9], %s50
      %s53 = sshll.u32 %s3, 4
      %s54 = int_to_ptr.vmem [resolvable:$true] %s53
      %56 = dma.vmem_to_smem %s54, 16, [#allocation10], [#allocation9]
    $region17: #{tpu_custom_call.1} parent=1 // pred_fallthru
      _
    // Predicated region
    $region18: #{tpu_custom_call.1} parent=1 // pred_check
      _
    $region19: #{tpu_custom_call.1} parent=1 // pred_check_branch
      %58 = sbr.rel (0) target = $region21
    $region20: #{tpu_custom_call.1} parent=1 // pred_region
      _
    $region21: #{tpu_custom_call.1} parent=1 // pred_fallthru
      _
    // Predicated region
    $region22: #{tpu_custom_call.1} parent=1 // pred_check
      _
    $region23: #{tpu_custom_call.1} parent=1 // pred_check_branch
      %60 = sbr.rel (0) target = $region25
    $region24: #{tpu_custom_call.1} parent=1 // pred_region
      %61 = dma.done [#allocation4], 256
    $region25: #{tpu_custom_call.1} parent=1 // pred_fallthru
      _
    // Predicated region
    $region26: #{tpu_custom_call.1} parent=1 // pred_check
      _
    $region27: #{tpu_custom_call.1} parent=1 // pred_check_branch
      %63 = sbr.rel (0) target = $region29
    $region28: #{tpu_custom_call.1} parent=1 // pred_region
      %64 = dma.done [#allocation6], 16
    $region29: #{tpu_custom_call.1} parent=1 // pred_fallthru
      _
    // Predicated region
    $region30: #{tpu_custom_call.1} parent=1 // pred_check
      _
    $region31: #{tpu_custom_call.1} parent=1 // pred_check_branch
      %66 = sbr.rel (0) target = $region33
    $region32: #{tpu_custom_call.1} parent=1 // pred_region
      %67 = dma.done [#allocation9], 16
    $region33: #{tpu_custom_call.1} parent=1 // pred_fallthru
      _
    // Predicated region
    $region34: #{tpu_custom_call.1} parent=1 // pred_check
      _
    $region35: #{tpu_custom_call.1} parent=1 // pred_check_branch
      %69 = sbr.rel (0) target = $region37
    $region36: #{tpu_custom_call.1} parent=1 // pred_region
      %70 = dma.done [#allocation9], 16
    $region37: #{tpu_custom_call.1} parent=1 // pred_fallthru
      _
    %71 = sfence
    %v72 = vld [vmem:[#allocation3] sm:$0xff]
    %s73 = scalar_lea.vmem [#allocation3], 8
    %v74 = vld [vmem:[%s73] sm:$0xff]
    %s75 = sld [smem:[#allocation2]]
    %s76 = sld [smem:[#allocation7]]
    %v77 = vstv %s76
    %v78 = vmul.f32 %v72, %v77
    %s79 = sld [smem:[#allocation7 + $0xa]]
    %v80 = vstv %s79
    %v81 = vmul.f32 %v74, %v80
    %v82 = vadd.f32 %v78, %v81
    %s83 = sld [smem:[#allocation8]]
    %v84 = vstv %s83
    %v85 = vadd.f32 %v82, %v84
    %v86 = vtanh.pop %v85
    %s87 = sld [smem:[#allocation10]]
    %v88 = vstv %s87
    %v89 = vmul.f32 %v88, %v86
    %v90 = vstv %s75
    %v91 = vadd.f32 %v90, %v89
    %s92 = sld [smem:[#allocation7 + $0x1]]
    %v93 = vstv %s92
    %v94 = vmul.f32 %v72, %v93
    %s95 = sld [smem:[#allocation7 + $0xb]]
    %v96 = vstv %s95
    %v97 = vmul.f32 %v74, %v96
    %v98 = vadd.f32 %v94, %v97
    %s99 = sld [smem:[#allocation8 + $0x1]]
    %v100 = vstv %s99
    %v101 = vadd.f32 %v98, %v100
    %v102 = vtanh.pop %v101
    %s103 = sld [smem:[#allocation10 + $0x1]]
    %v104 = vstv %s103
    %v105 = vmul.f32 %v104, %v102
    %v106 = vadd.f32 %v91, %v105
    %s107 = sld [smem:[#allocation7 + $0x2]]
    %v108 = vstv %s107
    %v109 = vmul.f32 %v72, %v108
    %s110 = sld [smem:[#allocation7 + $0xc]]
    %v111 = vstv %s110
    %v112 = vmul.f32 %v74, %v111
    %v113 = vadd.f32 %v109, %v112
    %s114 = sld [smem:[#allocation8 + $0x2]]
    %v115 = vstv %s114
    %v116 = vadd.f32 %v113, %v115
    %v117 = vtanh.pop %v116
    %s118 = sld [smem:[#allocation10 + $0x2]]
    %v119 = vstv %s118
    %v120 = vmul.f32 %v119, %v117
    %v121 = vadd.f32 %v106, %v120
    %s122 = sld [smem:[#allocation7 + $0x3]]
    %v123 = vstv %s122
    %v124 = vmul.f32 %v72, %v123
    %s125 = sld [smem:[#allocation7 + $0xd]]
    %v126 = vstv %s125
    %v127 = vmul.f32 %v74, %v126
    %v128 = vadd.f32 %v124, %v127
    %s129 = sld [smem:[#allocation8 + $0x3]]
    %v130 = vstv %s129
    %v131 = vadd.f32 %v128, %v130
    %v132 = vtanh.pop %v131
    %s133 = sld [smem:[#allocation10 + $0x3]]
    %v134 = vstv %s133
    %v135 = vmul.f32 %v134, %v132
    %v136 = vadd.f32 %v121, %v135
    %s137 = sld [smem:[#allocation7 + $0x4]]
    %v138 = vstv %s137
    %v139 = vmul.f32 %v72, %v138
    %s140 = sld [smem:[#allocation7 + $0xe]]
    %v141 = vstv %s140
    %v142 = vmul.f32 %v74, %v141
    %v143 = vadd.f32 %v139, %v142
    %s144 = sld [smem:[#allocation8 + $0x4]]
    %v145 = vstv %s144
    %v146 = vadd.f32 %v143, %v145
    %v147 = vtanh.pop %v146
    %s148 = sld [smem:[#allocation10 + $0x4]]
    %v149 = vstv %s148
    %v150 = vmul.f32 %v149, %v147
    %v151 = vadd.f32 %v136, %v150
    %s152 = sld [smem:[#allocation7 + $0x5]]
    %v153 = vstv %s152
    %v154 = vmul.f32 %v72, %v153
    %s155 = sld [smem:[#allocation7 + $0xf]]
    %v156 = vstv %s155
    %v157 = vmul.f32 %v74, %v156
    %v158 = vadd.f32 %v154, %v157
    %s159 = sld [smem:[#allocation8 + $0x5]]
    %v160 = vstv %s159
    %v161 = vadd.f32 %v158, %v160
    %v162 = vtanh.pop %v161
    %s163 = sld [smem:[#allocation10 + $0x5]]
    %v164 = vstv %s163
    %v165 = vmul.f32 %v164, %v162
    %v166 = vadd.f32 %v151, %v165
    %s167 = sld [smem:[#allocation7 + $0x6]]
    %v168 = vstv %s167
    %v169 = vmul.f32 %v72, %v168
    %s170 = sld [smem:[#allocation7 + $0x10]]
    %v171 = vstv %s170
    %v172 = vmul.f32 %v74, %v171
    %v173 = vadd.f32 %v169, %v172
    %s174 = sld [smem:[#allocation8 + $0x6]]
    %v175 = vstv %s174
    %v176 = vadd.f32 %v173, %v175
    %v177 = vtanh.pop %v176
    %s178 = sld [smem:[#allocation10 + $0x6]]
    %v179 = vstv %s178
    %v180 = vmul.f32 %v179, %v177
    %v181 = vadd.f32 %v166, %v180
    %s182 = sld [smem:[#allocation7 + $0x7]]
    %v183 = vstv %s182
    %v184 = vmul.f32 %v72, %v183
    %s185 = sld [smem:[#allocation7 + $0x11]]
    %v186 = vstv %s185
    %v187 = vmul.f32 %v74, %v186
    %v188 = vadd.f32 %v184, %v187
    %s189 = sld [smem:[#allocation8 + $0x7]]
    %v190 = vstv %s189
    %v191 = vadd.f32 %v188, %v190
    %v192 = vtanh.pop %v191
    %s193 = sld [smem:[#allocation10 + $0x7]]
    %v194 = vstv %s193
    %v195 = vmul.f32 %v194, %v192
    %v196 = vadd.f32 %v181, %v195
    %s197 = sld [smem:[#allocation7 + $0x8]]
    %v198 = vstv %s197
    %v199 = vmul.f32 %v72, %v198
    %s200 = sld [smem:[#allocation7 + $0x12]]
    %v201 = vstv %s200
    %v202 = vmul.f32 %v74, %v201
    %v203 = vadd.f32 %v199, %v202
    %s204 = sld [smem:[#allocation8 + $0x8]]
    %v205 = vstv %s204
    %v206 = vadd.f32 %v203, %v205
    %v207 = vtanh.pop %v206
    %s208 = sld [smem:[#allocation10 + $0x8]]
    %v209 = vstv %s208
    %v210 = vmul.f32 %v209, %v207
    %v211 = vadd.f32 %v196, %v210
    %s212 = sld [smem:[#allocation7 + $0x9]]
    %v213 = vstv %s212
    %v214 = vmul.f32 %v72, %v213
    %s215 = sld [smem:[#allocation7 + $0x13]]
    %v216 = vstv %s215
    %v217 = vmul.f32 %v74, %v216
    %v218 = vadd.f32 %v214, %v217
    %s219 = sld [smem:[#allocation8 + $0x9]]
    %v220 = vstv %s219
    %v221 = vadd.f32 %v218, %v220
    %v222 = vtanh.pop %v221
    %s223 = sld [smem:[#allocation10 + $0x9]]
    %v224 = vstv %s223
    %v225 = vmul.f32 %v224, %v222
    %v226 = vadd.f32 %v211, %v225
    %v227 = vmul.f32 %v226, 0.5
    %v228 = vtanh.pop %v227
    %v229 = vadd.f32 %v228, 1.0
    %v230 = vmul.f32 %v229, 0.5
    %231 = vst [vmem:[#allocation11] sm:$0xff] %v230
    // Predicated region
    $region38: #{tpu_custom_call.1} parent=1 // pred_check
      _
    $region39: #{tpu_custom_call.1} parent=1 // pred_check_branch
      %233 = sbr.rel (0) target = $region41
    $region40: #{tpu_custom_call.1} parent=1 // pred_region
      %s235 = ssub.s32 128, 128
      %236 = vsyncadd [#allocation5], %s235
      %s238 = sshll.u32 [#allocation11], 4
      %s239 = int_to_ptr.vmem [resolvable:$true] %s238
      %241 = dma.vmem_to_hbm [thread:$0]  %s239, 128, %s5, [#allocation5]
    $region41: #{tpu_custom_call.1} parent=1 // pred_fallthru
      _
    // Predicated region
    $region42: #{tpu_custom_call.1} parent=1 // pred_check
      _
    $region43: #{tpu_custom_call.1} parent=1 // pred_check_branch
      %243 = sbr.rel (0) target = $region45
    $region44: #{tpu_custom_call.1} parent=1 // pred_region
      %244 = dma.done [#allocation5], 128
    $region45: #{tpu_custom_call.1} parent=1 // pred_fallthru
      _
    %245 = vsyncpa [#allocation4], 1
    %246 = vsyncpa [#allocation5], 1
    %247 = vsyncpa [#allocation6], 1
    %248 = vsyncpa [#allocation9], 1

</llo_original>
